<compile_context>
chip_gen: v7x
topology: tpu7x:2x2x1
jax: 0.10.0
libtpu: 0.0.40
codegen_flags: <defaults>
</compile_context>

<pallas_src>
import math
import numpy as np
import jax
import jax.numpy as jnp
from jax.experimental import pallas as pl
from jax.experimental.pallas import tpu as pltpu

# ---------------- problem sizes (small, consistent with the module) ----------------
B = 2           # batch
S = 8           # sequence length
D_MODEL = 32    # d_model
N_HEADS = 4
HEAD_DIM = D_MODEL // N_HEADS
D_MLP = 64
MAX_SEQ_LEN = 16
LN_EPS = 0.01
INIT_SCALE = 1.0

NH3 = 3 * HEAD_DIM          # per-head fused qkv width (24)

# packed-vector row indices (single (8,128) input)
_ROW_LN1W, _ROW_LN1B, _ROW_LN2W, _ROW_LN2B, _ROW_WSUM, _ROW_B2, _ROW_B1 = range(7)


# ---------------------------------- kernel -----------------------------------------
def transformer_block_kernel(
    x_ref,        # (B*S, D)          activations
    bdmask_ref,   # (R, R)            block-diagonal + causal mask, R = B*N*S
    vecs_ref,     # (8, 128)          packed small vectors
    wqkv_ref,     # (D, N*3*H)        fused QKV weight, columns (head, {q,k,v}, h); q pre-scaled
    w1_ref,       # (D, D_MLP)
    w2_ref,       # (D_MLP, D)
    o_ref,        # (B*S, D)
):
    rows = x_ref.shape[0]          # B*S (static)
    Bb = rows // S

    # ---- unpack the single packed-vector tile ----
    vecs = vecs_ref[...]
    ln1w = vecs[_ROW_LN1W:_ROW_LN1W + 1, 0:D_MODEL]
    ln1b = vecs[_ROW_LN1B:_ROW_LN1B + 1, 0:D_MODEL]
    ln2w = vecs[_ROW_LN2W:_ROW_LN2W + 1, 0:D_MODEL]
    ln2b = vecs[_ROW_LN2B:_ROW_LN2B + 1, 0:D_MODEL]
    wsum = vecs[_ROW_WSUM:_ROW_WSUM + 1, 0:D_MODEL]
    b2 = vecs[_ROW_B2:_ROW_B2 + 1, 0:D_MODEL]
    b1 = vecs[_ROW_B1:_ROW_B1 + 1, 0:D_MLP]

    x = x_ref[...]                                                    # (rows, D)

    # ---- LayerNorm 1 (biased variance, eps inside sqrt, like nn.LayerNorm) ----
    mu = jnp.mean(x, axis=-1, keepdims=True)
    var = jnp.mean((x - mu) ** 2, axis=-1, keepdims=True)
    xn = (x - mu) * jax.lax.rsqrt(var + LN_EPS)
    xn = xn * ln1w + ln1b                                             # (rows, D)

    # ---- fused QKV: one matmul over all rows (q columns already scaled by 1/sqrt(H)) ----
    qkv = jnp.dot(xn, wqkv_ref[...], preferred_element_type=jnp.float32)   # (rows, N*3H)

    # reorder rows (b, s) -> (b, n, s): static 2-D slices + one sublane concat
    qkv_r = jnp.concatenate(
        [qkv[b * S:(b + 1) * S, n * NH3:(n + 1) * NH3]
         for b in range(Bb) for n in range(N_HEADS)],
        axis=0)                                                       # (R, 3H), rows (b,n,s)
    q_r = qkv_r[:, 0:HEAD_DIM]                                        # (R, H)
    k_r = qkv_r[:, HEAD_DIM:2 * HEAD_DIM]                             # (R, H)
    v_t = qkv_r[:, 2 * HEAD_DIM:3 * HEAD_DIM].T                       # (H, R), off critical path

    # ---- ONE block-diagonal QK^T matmul + ONE 64-lane-wide fused softmax ----
    scores = jax.lax.dot_general(q_r, k_r, (((1,), (1,)), ((), ())),
                                 preferred_element_type=jnp.float32)  # (R, R)
    scores = scores + bdmask_ref[...]                                 # block-diag + causal

    m = jnp.max(scores, axis=-1, keepdims=True)
    e = jnp.exp(scores - m)                                           # off-block entries underflow to 0
    den = jnp.sum(e, axis=-1, keepdims=True)
    r = pl.reciprocal(den, approx=True)                               # EUP seed
    r = r * (2.0 - den * r)                                           # 1 Newton step -> f32 accurate
    p = e * r                                                         # (R, R)

    # ---- ONE PV matmul, emitted already transposed: ho_t[h, (b,n,s)] = sum_k v[k,h] p[q,k] ----
    ho_t = jax.lax.dot_general(v_t, p, (((1,), (1,)), ((), ())),
                               preferred_element_type=jnp.float32)    # (H, R)

    # Degenerate W_out projection of the reference (requires HEAD_DIM == S):
    #   attn[(b, h), n*S + s] = ho_t[h, b*N*S + n*S + s] * wsum[n*S + s]
    attn = jnp.concatenate(
        [ho_t[:, b * D_MODEL:(b + 1) * D_MODEL] for b in range(Bb)], axis=0)  # (rows, D)
    attn = attn * wsum

    h1 = xn + attn                                                    # residual (post-ln1 x)

    # ---- LayerNorm 2 ----
    mu2 = jnp.mean(h1, axis=-1, keepdims=True)
    var2 = jnp.mean((h1 - mu2) ** 2, axis=-1, keepdims=True)
    h2 = (h1 - mu2) * jax.lax.rsqrt(var2 + LN_EPS)
    h2 = h2 * ln2w + ln2b                                             # (rows, D)

    # ---- MLP ----
    hid = jnp.dot(h2, w1_ref[...], preferred_element_type=jnp.float32) + b1
    hid = jnp.maximum(hid, 0.0)
    mlp = jnp.dot(hid, w2_ref[...], preferred_element_type=jnp.float32) + b2

    o_ref[...] = h2 + mlp                                             # (rows, D)


# --------------------------- one-time parameter prep --------------------------------
def prepare_params(params, batch):
    """Hoists ALL weight-layout glue out of the per-call path (run once, cache result)."""
    # The W_out collapse below reproduces the reference's degenerate projection ONLY
    # because head_dim == seq_len; guard it explicitly (perf-review correctness note).
    assert HEAD_DIM == S, "W_out degenerate-collapse shortcut requires head_dim == seq_len"

    inv_sqrt_h = 1.0 / math.sqrt(HEAD_DIM)

    # fused QKV weight, columns ordered (head, {q,k,v}, h); fold 1/sqrt(H) into q columns
    qscale = jnp.concatenate([jnp.full((HEAD_DIM,), inv_sqrt_h, jnp.float32),
                              jnp.ones((2 * HEAD_DIM,), jnp.float32)])
    w = params["W_qkv"] * qscale                                       # (N, D, 3H)
    wqkv = jnp.transpose(w, (1, 0, 2)).reshape(D_MODEL, N_HEADS * NH3)  # (D, 96)

    # only the column sum of W_out is ever used by the reference projection
    wsum = params["W_out"].reshape(-1, D_MODEL).sum(axis=0)            # (D,)

    # pack the 7 tiny vectors into a single (8, 128) tile (one DMA)
    vecs = jnp.zeros((8, 128), jnp.float32)
    vecs = vecs.at[_ROW_LN1W, :D_MODEL].set(params["ln1_w"])
    vecs = vecs.at[_ROW_LN1B, :D_MODEL].set(params["ln1_b"])
    vecs = vecs.at[_ROW_LN2W, :D_MODEL].set(params["ln2_w"])
    vecs = vecs.at[_ROW_LN2B, :D_MODEL].set(params["ln2_b"])
    vecs = vecs.at[_ROW_WSUM, :D_MODEL].set(wsum)
    vecs = vecs.at[_ROW_B2, :D_MODEL].set(params["fc2_b"])
    vecs = vecs.at[_ROW_B1, :D_MLP].set(params["fc1_b"])

    # block-diagonal (over batch*head) + causal mask for the fused (R, R) scores
    R = batch * N_HEADS * S
    causal = params["mask"][:S, :S]                                    # (S, S)
    grp = jnp.arange(R) // S                                           # group = (b, n)
    same = grp[:, None] == grp[None, :]
    tiled = jnp.tile(causal, (batch * N_HEADS, batch * N_HEADS))       # (R, R)
    bdmask = jnp.where(same, tiled, jnp.float32(-1e10))

    return {
        "wqkv": wqkv,
        "vecs": vecs,
        "bdmask": bdmask,
        "w1": params["fc1_w"].T,        # (D, D_MLP)
        "w2": params["fc2_w"].T,        # (D_MLP, D)
    }


# --------------------------------- wrapper ------------------------------------------
def transformer_block(x, prep):
    """x: (B, S, D_MODEL) float32; prep: output of prepare_params (cached)."""
    Bx, Sx, Dx = x.shape
    assert (Sx, Dx) == (S, D_MODEL)
    R = Bx * N_HEADS * S

    x2 = x.reshape(Bx * S, D_MODEL)                                    # contiguous reshape

    def full(a):
        return pl.BlockSpec(a.shape, lambda i: (0,) * a.ndim)

    flops = (2 * Bx * S * D_MODEL * 3 * N_HEADS * HEAD_DIM             # fused QKV
             + 2 * R * R * HEAD_DIM                                    # block-diag QK^T
             + 2 * R * R * HEAD_DIM                                    # block-diag PV
             + 2 * Bx * S * D_MODEL * D_MLP                            # fc1
             + 2 * Bx * S * D_MLP * D_MODEL)                           # fc2
    transcendentals = R * R + 2 * Bx * S + R                           # exp + 2x rsqrt + recip
    bytes_acc = 4 * (2 * Bx * S * D_MODEL                              # x in + out
                     + R * R                                           # mask
                     + 8 * 128                                         # packed vectors
                     + D_MODEL * 3 * N_HEADS * HEAD_DIM                # wqkv
                     + 2 * D_MODEL * D_MLP)                            # mlp weights
    cost = pl.CostEstimate(flops=int(flops), transcendentals=int(transcendentals),
                           bytes_accessed=int(bytes_acc))

    grid_spec = pltpu.PrefetchScalarGridSpec(
        num_scalar_prefetch=0,
        grid=(1,),                                                     # single step on all gens
        in_specs=[
            pl.BlockSpec((Bx * S, D_MODEL), lambda i: (0, 0)),         # x
            full(prep["bdmask"]),
            full(prep["vecs"]),
            full(prep["wqkv"]),
            full(prep["w1"]),
            full(prep["w2"]),
        ],
        out_specs=pl.BlockSpec((Bx * S, D_MODEL), lambda i: (0, 0)),
    )

    out = pl.pallas_call(
        transformer_block_kernel,
        out_shape=jax.ShapeDtypeStruct((Bx * S, D_MODEL), jnp.float32),
        grid_spec=grid_spec,
        compiler_params=pltpu.CompilerParams(dimension_semantics=("arbitrary",)),
        cost_estimate=cost,
    )(x2, prep["bdmask"], prep["vecs"], prep["wqkv"], prep["w1"], prep["w2"])

    return out.reshape(Bx, S, D_MODEL)


# ------------------------------ pure-JAX reference ----------------------------------
def reference(x, p):
    def ln(v, w, b):
        mu = jnp.mean(v, axis=-1, keepdims=True)
        var = jnp.mean((v - mu) ** 2, axis=-1, keepdims=True)
        return (v - mu) / jnp.sqrt(var + LN_EPS) * w + b

    x = ln(x, p["ln1_w"], p["ln1_b"])
    qkv = jnp.einsum("bsd,ndh->bnsh", x, p["W_qkv"])
    q, k, v = jnp.split(qkv, 3, axis=-1)
    attn = jnp.einsum("bnqh,bnkh->bnqk", q, k) / np.sqrt(HEAD_DIM)
    attn = attn + p["mask"][:S, :S]
    attn = jax.nn.softmax(attn, axis=-1)
    out = jnp.einsum("bnqk,bnkh->bnqh", attn, v)
    out = out.reshape(out.shape[0], -1, out.shape[-2])                 # (B, n*h, S)
    out = jnp.einsum("bds,nhd->bsd", out, p["W_out"])
    x = x + out
    x = ln(x, p["ln2_w"], p["ln2_b"])
    h = jnp.maximum(x @ p["fc1_w"].T + p["fc1_b"], 0.0)
    h = h @ p["fc2_w"].T + p["fc2_b"]
    return x + h


# ------------------------------------ main ------------------------------------------
if __name__ == "__main__":
    key = jax.random.PRNGKey(0)
    ks = jax.random.split(key, 11)

    params = {
        "W_qkv": jax.random.normal(ks[0], (N_HEADS, D_MODEL, HEAD_DIM * 3), jnp.float32)
                 / np.sqrt(D_MODEL) * INIT_SCALE,
        "W_out": jax.random.normal(ks[1], (N_HEADS, HEAD_DIM, HEAD_DIM * N_HEADS), jnp.float32)
                 / np.sqrt(D_MODEL) * INIT_SCALE,
        "mask": -1e10 * (1.0 - jnp.tril(jnp.ones((MAX_SEQ_LEN, MAX_SEQ_LEN), jnp.float32))),
        "ln1_w": 1.0 + 0.1 * jax.random.normal(ks[2], (D_MODEL,), jnp.float32),
        "ln1_b": 0.1 * jax.random.normal(ks[3], (D_MODEL,), jnp.float32),
        "ln2_w": 1.0 + 0.1 * jax.random.normal(ks[4], (D_MODEL,), jnp.float32),
        "ln2_b": 0.1 * jax.random.normal(ks[5], (D_MODEL,), jnp.float32),
        "fc1_w": jax.random.normal(ks[6], (D_MLP, D_MODEL), jnp.float32) / np.sqrt(D_MODEL),
        "fc1_b": 0.1 * jax.random.normal(ks[7], (D_MLP,), jnp.float32),
        "fc2_w": jax.random.normal(ks[8], (D_MODEL, D_MLP), jnp.float32) / np.sqrt(D_MLP),
        "fc2_b": 0.1 * jax.random.normal(ks[9], (D_MODEL,), jnp.float32),
    }

    x = jax.random.normal(ks[10], (B, S, D_MODEL), jnp.float32)

    prep = jax.tree_util.tree_map(jnp.asarray, prepare_params(params, B))  # one-time prep, cached

    out = jax.block_until_ready(transformer_block(x, prep))
    ref = jax.block_until_ready(reference(x, params))
    np.testing.assert_allclose(np.asarray(out), np.asarray(ref), rtol=1e-4, atol=1e-4)

    print("KERNEL_OK")
</pallas_src>

<mosaic_0001>
module attributes {stable_mosaic.version = 11 : i64} {
  func.func @transformer_block_kernel(%arg0: i32, %arg1: memref<16x32xf32, #tpu.memory_space<vmem>>, %arg2: memref<64x64xf32, #tpu.memory_space<vmem>>, %arg3: memref<8x128xf32, #tpu.memory_space<vmem>>, %arg4: memref<32x96xf32, #tpu.memory_space<vmem>>, %arg5: memref<32x64xf32, #tpu.memory_space<vmem>>, %arg6: memref<64x32xf32, #tpu.memory_space<vmem>>, %arg7: memref<16x32xf32, #tpu.memory_space<vmem>>) attributes {dimension_semantics = [#tpu.dimension_semantics<arbitrary>], iteration_bounds = array<i64: 1>, scalar_prefetch = 0 : i64, scratch_operands = 0 : i64, tpu.core_type = #tpu.core_type<tc>, window_params = [{pipeline_mode = #tpu.pipeline_mode<synchronous>, transform_indices = @transform_0, window_bounds = array<i64: 16, 32>}, {pipeline_mode = #tpu.pipeline_mode<synchronous>, transform_indices = @transform_1, window_bounds = array<i64: 64, 64>}, {pipeline_mode = #tpu.pipeline_mode<synchronous>, transform_indices = @transform_2, window_bounds = array<i64: 8, 128>}, {pipeline_mode = #tpu.pipeline_mode<synchronous>, transform_indices = @transform_3, window_bounds = array<i64: 32, 96>}, {pipeline_mode = #tpu.pipeline_mode<synchronous>, transform_indices = @transform_4, window_bounds = array<i64: 32, 64>}, {pipeline_mode = #tpu.pipeline_mode<synchronous>, transform_indices = @transform_5, window_bounds = array<i64: 64, 32>}, {pipeline_mode = #tpu.pipeline_mode<synchronous>, transform_indices = @transform_6, window_bounds = array<i64: 16, 32>}]} {
    %c0 = arith.constant 0 : index
    %c0_0 = arith.constant 0 : index
    %0 = vector.load %arg3[%c0, %c0_0] : memref<8x128xf32, #tpu.memory_space<vmem>>, vector<8x128xf32>
    %1 = vector.extract_strided_slice %0 {offsets = [0, 0], sizes = [1, 32], strides = [1, 1]} : vector<8x128xf32> to vector<1x32xf32>
    %2 = vector.extract_strided_slice %0 {offsets = [1, 0], sizes = [1, 32], strides = [1, 1]} : vector<8x128xf32> to vector<1x32xf32>
    %3 = vector.extract_strided_slice %0 {offsets = [2, 0], sizes = [1, 32], strides = [1, 1]} : vector<8x128xf32> to vector<1x32xf32>
    %4 = vector.extract_strided_slice %0 {offsets = [3, 0], sizes = [1, 32], strides = [1, 1]} : vector<8x128xf32> to vector<1x32xf32>
    %5 = vector.extract_strided_slice %0 {offsets = [4, 0], sizes = [1, 32], strides = [1, 1]} : vector<8x128xf32> to vector<1x32xf32>
    %6 = vector.extract_strided_slice %0 {offsets = [5, 0], sizes = [1, 32], strides = [1, 1]} : vector<8x128xf32> to vector<1x32xf32>
    %7 = vector.extract_strided_slice %0 {offsets = [6, 0], sizes = [1, 64], strides = [1, 1]} : vector<8x128xf32> to vector<1x64xf32>
    %c0_1 = arith.constant 0 : index
    %c0_2 = arith.constant 0 : index
    %8 = vector.load %arg1[%c0_1, %c0_2] : memref<16x32xf32, #tpu.memory_space<vmem>>, vector<16x32xf32>
    %cst = arith.constant dense<0.000000e+00> : vector<16xf32>
    %9 = vector.multi_reduction <add>, %8, %cst [1] : vector<16x32xf32> to vector<16xf32>
    %10 = vector.shape_cast %9 : vector<16xf32> to vector<16x1xf32>
    %cst_3 = arith.constant 3.200000e+01 : f32
    %11 = vector.broadcast %cst_3 : f32 to vector<16x1xf32>
    %12 = arith.divf %10, %11 : vector<16x1xf32>
    %13 = vector.broadcast %12 : vector<16x1xf32> to vector<16x32xf32>
    %14 = arith.subf %8, %13 : vector<16x32xf32>
    %15 = arith.mulf %14, %14 : vector<16x32xf32>
    %cst_4 = arith.constant dense<0.000000e+00> : vector<16xf32>
    %16 = vector.multi_reduction <add>, %15, %cst_4 [1] : vector<16x32xf32> to vector<16xf32>
    %17 = vector.shape_cast %16 : vector<16xf32> to vector<16x1xf32>
    %cst_5 = arith.constant 3.200000e+01 : f32
    %18 = vector.broadcast %cst_5 : f32 to vector<16x1xf32>
    %19 = arith.divf %17, %18 : vector<16x1xf32>
    %20 = vector.broadcast %12 : vector<16x1xf32> to vector<16x32xf32>
    %21 = arith.subf %8, %20 : vector<16x32xf32>
    %cst_6 = arith.constant 0.00999999977 : f32
    %22 = vector.broadcast %cst_6 : f32 to vector<16x1xf32>
    %23 = arith.addf %19, %22 : vector<16x1xf32>
    %24 = math.rsqrt %23 : vector<16x1xf32>
    %25 = vector.broadcast %24 : vector<16x1xf32> to vector<16x32xf32>
    %26 = arith.mulf %21, %25 : vector<16x32xf32>
    %27 = vector.broadcast %1 : vector<1x32xf32> to vector<16x32xf32>
    %28 = arith.mulf %26, %27 : vector<16x32xf32>
    %29 = vector.broadcast %2 : vector<1x32xf32> to vector<16x32xf32>
    %30 = arith.addf %28, %29 : vector<16x32xf32>
    %c0_7 = arith.constant 0 : index
    %c0_8 = arith.constant 0 : index
    %31 = vector.load %arg4[%c0_7, %c0_8] : memref<32x96xf32, #tpu.memory_space<vmem>>, vector<32x96xf32>
    %cst_9 = arith.constant dense<0.000000e+00> : vector<16x96xf32>
    %32 = tpu.matmul %30, %31, %cst_9 {dimension_numbers = #tpu.dot_dimension_numbers<[1], [0], [0], [1], [0, 0, 1, 1], [], []>} : vector<16x32xf32>, vector<32x96xf32>, vector<16x96xf32> -> vector<16x96xf32>
    %33 = vector.extract_strided_slice %32 {offsets = [0, 0], sizes = [8, 24], strides = [1, 1]} : vector<16x96xf32> to vector<8x24xf32>
    %34 = vector.extract_strided_slice %32 {offsets = [0, 24], sizes = [8, 24], strides = [1, 1]} : vector<16x96xf32> to vector<8x24xf32>
    %35 = vector.extract_strided_slice %32 {offsets = [0, 48], sizes = [8, 24], strides = [1, 1]} : vector<16x96xf32> to vector<8x24xf32>
    %36 = vector.extract_strided_slice %32 {offsets = [0, 72], sizes = [8, 24], strides = [1, 1]} : vector<16x96xf32> to vector<8x24xf32>
    %37 = vector.extract_strided_slice %32 {offsets = [8, 0], sizes = [8, 24], strides = [1, 1]} : vector<16x96xf32> to vector<8x24xf32>
    %38 = vector.extract_strided_slice %32 {offsets = [8, 24], sizes = [8, 24], strides = [1, 1]} : vector<16x96xf32> to vector<8x24xf32>
    %39 = vector.extract_strided_slice %32 {offsets = [8, 48], sizes = [8, 24], strides = [1, 1]} : vector<16x96xf32> to vector<8x24xf32>
    %40 = vector.extract_strided_slice %32 {offsets = [8, 72], sizes = [8, 24], strides = [1, 1]} : vector<16x96xf32> to vector<8x24xf32>
    %41 = tpu.concatenate %33, %34, %35, %36, %37, %38, %39, %40 in 0 : vector<8x24xf32>, vector<8x24xf32>, vector<8x24xf32>, vector<8x24xf32>, vector<8x24xf32>, vector<8x24xf32>, vector<8x24xf32>, vector<8x24xf32> -> vector<64x24xf32>
    %42 = vector.extract_strided_slice %41 {offsets = [0, 0], sizes = [64, 8], strides = [1, 1]} : vector<64x24xf32> to vector<64x8xf32>
    %43 = vector.extract_strided_slice %41 {offsets = [0, 8], sizes = [64, 8], strides = [1, 1]} : vector<64x24xf32> to vector<64x8xf32>
    %44 = vector.extract_strided_slice %41 {offsets = [0, 16], sizes = [64, 8], strides = [1, 1]} : vector<64x24xf32> to vector<64x8xf32>
    %45 = tpu.transpose %44, [1, 0] : vector<64x8xf32> -> vector<8x64xf32>
    %cst_10 = arith.constant dense<0.000000e+00> : vector<64x64xf32>
    %46 = tpu.matmul %42, %43, %cst_10 {dimension_numbers = #tpu.dot_dimension_numbers<[1], [1], [0], [0], [0, 0, 1, 0], [], []>} : vector<64x8xf32>, vector<64x8xf32>, vector<64x64xf32> -> vector<64x64xf32>
    %c0_11 = arith.constant 0 : index
    %c0_12 = arith.constant 0 : index
    %47 = vector.load %arg2[%c0_11, %c0_12] : memref<64x64xf32, #tpu.memory_space<vmem>>, vector<64x64xf32>
    %48 = arith.addf %46, %47 : vector<64x64xf32>
    %cst_13 = arith.constant dense<0xFF800000> : vector<64xf32>
    %49 = vector.multi_reduction <maximumf>, %48, %cst_13 [1] : vector<64x64xf32> to vector<64xf32>
    %50 = vector.shape_cast %49 : vector<64xf32> to vector<64x1xf32>
    %51 = vector.broadcast %50 : vector<64x1xf32> to vector<64x64xf32>
    %52 = arith.subf %48, %51 : vector<64x64xf32>
    %53 = math.exp %52 : vector<64x64xf32>
    %cst_14 = arith.constant dense<0.000000e+00> : vector<64xf32>
    %54 = vector.multi_reduction <add>, %53, %cst_14 [1] : vector<64x64xf32> to vector<64xf32>
    %55 = vector.shape_cast %54 : vector<64xf32> to vector<64x1xf32>
    %56 = tpu.reciprocal %55 {approx = true} : vector<64x1xf32> -> vector<64x1xf32>
    %57 = arith.mulf %55, %56 : vector<64x1xf32>
    %cst_15 = arith.constant 2.000000e+00 : f32
    %58 = vector.broadcast %cst_15 : f32 to vector<64x1xf32>
    %59 = arith.subf %58, %57 : vector<64x1xf32>
    %60 = arith.mulf %56, %59 : vector<64x1xf32>
    %61 = vector.broadcast %60 : vector<64x1xf32> to vector<64x64xf32>
    %62 = arith.mulf %53, %61 : vector<64x64xf32>
    %cst_16 = arith.constant dense<0.000000e+00> : vector<8x64xf32>
    %63 = tpu.matmul %45, %62, %cst_16 {dimension_numbers = #tpu.dot_dimension_numbers<[1], [1], [0], [0], [0, 0, 1, 0], [], []>} : vector<8x64xf32>, vector<64x64xf32>, vector<8x64xf32> -> vector<8x64xf32>
    %64 = vector.extract_strided_slice %63 {offsets = [0, 0], sizes = [8, 32], strides = [1, 1]} : vector<8x64xf32> to vector<8x32xf32>
    %65 = vector.extract_strided_slice %63 {offsets = [0, 32], sizes = [8, 32], strides = [1, 1]} : vector<8x64xf32> to vector<8x32xf32>
    %66 = tpu.concatenate %64, %65 in 0 : vector<8x32xf32>, vector<8x32xf32> -> vector<16x32xf32>
    %67 = vector.broadcast %5 : vector<1x32xf32> to vector<16x32xf32>
    %68 = arith.mulf %66, %67 : vector<16x32xf32>
    %69 = arith.addf %30, %68 : vector<16x32xf32>
    %cst_17 = arith.constant dense<0.000000e+00> : vector<16xf32>
    %70 = vector.multi_reduction <add>, %69, %cst_17 [1] : vector<16x32xf32> to vector<16xf32>
    %71 = vector.shape_cast %70 : vector<16xf32> to vector<16x1xf32>
    %cst_18 = arith.constant 3.200000e+01 : f32
    %72 = vector.broadcast %cst_18 : f32 to vector<16x1xf32>
    %73 = arith.divf %71, %72 : vector<16x1xf32>
    %74 = vector.broadcast %73 : vector<16x1xf32> to vector<16x32xf32>
    %75 = arith.subf %69, %74 : vector<16x32xf32>
    %76 = arith.mulf %75, %75 : vector<16x32xf32>
    %cst_19 = arith.constant dense<0.000000e+00> : vector<16xf32>
    %77 = vector.multi_reduction <add>, %76, %cst_19 [1] : vector<16x32xf32> to vector<16xf32>
    %78 = vector.shape_cast %77 : vector<16xf32> to vector<16x1xf32>
    %cst_20 = arith.constant 3.200000e+01 : f32
    %79 = vector.broadcast %cst_20 : f32 to vector<16x1xf32>
    %80 = arith.divf %78, %79 : vector<16x1xf32>
    %81 = vector.broadcast %73 : vector<16x1xf32> to vector<16x32xf32>
    %82 = arith.subf %69, %81 : vector<16x32xf32>
    %cst_21 = arith.constant 0.00999999977 : f32
    %83 = vector.broadcast %cst_21 : f32 to vector<16x1xf32>
    %84 = arith.addf %80, %83 : vector<16x1xf32>
    %85 = math.rsqrt %84 : vector<16x1xf32>
    %86 = vector.broadcast %85 : vector<16x1xf32> to vector<16x32xf32>
    %87 = arith.mulf %82, %86 : vector<16x32xf32>
    %88 = vector.broadcast %3 : vector<1x32xf32> to vector<16x32xf32>
    %89 = arith.mulf %87, %88 : vector<16x32xf32>
    %90 = vector.broadcast %4 : vector<1x32xf32> to vector<16x32xf32>
    %91 = arith.addf %89, %90 : vector<16x32xf32>
    %c0_22 = arith.constant 0 : index
    %c0_23 = arith.constant 0 : index
    %92 = vector.load %arg5[%c0_22, %c0_23] : memref<32x64xf32, #tpu.memory_space<vmem>>, vector<32x64xf32>
    %cst_24 = arith.constant dense<0.000000e+00> : vector<16x64xf32>
    %93 = tpu.matmul %91, %92, %cst_24 {dimension_numbers = #tpu.dot_dimension_numbers<[1], [0], [0], [1], [0, 0, 1, 1], [], []>} : vector<16x32xf32>, vector<32x64xf32>, vector<16x64xf32> -> vector<16x64xf32>
    %94 = vector.broadcast %7 : vector<1x64xf32> to vector<16x64xf32>
    %95 = arith.addf %93, %94 : vector<16x64xf32>
    %cst_25 = arith.constant 0.000000e+00 : f32
    %96 = vector.broadcast %cst_25 : f32 to vector<16x64xf32>
    %97 = arith.maximumf %95, %96 : vector<16x64xf32>
    %c0_26 = arith.constant 0 : index
    %c0_27 = arith.constant 0 : index
    %98 = vector.load %arg6[%c0_26, %c0_27] : memref<64x32xf32, #tpu.memory_space<vmem>>, vector<64x32xf32>
    %cst_28 = arith.constant dense<0.000000e+00> : vector<16x32xf32>
    %99 = tpu.matmul %97, %98, %cst_28 {dimension_numbers = #tpu.dot_dimension_numbers<[1], [0], [0], [1], [0, 0, 1, 1], [], []>} : vector<16x64xf32>, vector<64x32xf32>, vector<16x32xf32> -> vector<16x32xf32>
    %100 = vector.broadcast %6 : vector<1x32xf32> to vector<16x32xf32>
    %101 = arith.addf %99, %100 : vector<16x32xf32>
    %102 = arith.addf %91, %101 : vector<16x32xf32>
    %c0_29 = arith.constant 0 : index
    %c0_30 = arith.constant 0 : index
    %103 = vector.load %arg7[%c0_29, %c0_30] : memref<16x32xf32, #tpu.memory_space<vmem>>, vector<16x32xf32>
    tpu.vector_store %arg7[%c0_29, %c0_30], %102 {strides = array<i32>} : memref<16x32xf32, #tpu.memory_space<vmem>>, vector<16x32xf32>,
    return
  }
  func.func @transform_0(%arg0: i32) -> (i32, i32) {
    %c0_i32 = arith.constant 0 : i32
    %c0_i32_0 = arith.constant 0 : i32
    %c0_i32_1 = arith.constant 0 : i32
    return %c0_i32, %c0_i32_0 : i32, i32
  }
  func.func @transform_1(%arg0: i32) -> (i32, i32) {
    %c0_i32 = arith.constant 0 : i32
    %c0_i32_0 = arith.constant 0 : i32
    %c0_i32_1 = arith.constant 0 : i32
    return %c0_i32, %c0_i32_0 : i32, i32
  }
  func.func @transform_2(%arg0: i32) -> (i32, i32) {
    %c0_i32 = arith.constant 0 : i32
    %c0_i32_0 = arith.constant 0 : i32
    %c0_i32_1 = arith.constant 0 : i32
    return %c0_i32, %c0_i32_0 : i32, i32
  }
  func.func @transform_3(%arg0: i32) -> (i32, i32) {
    %c0_i32 = arith.constant 0 : i32
    %c0_i32_0 = arith.constant 0 : i32
    %c0_i32_1 = arith.constant 0 : i32
    return %c0_i32, %c0_i32_0 : i32, i32
  }
  func.func @transform_4(%arg0: i32) -> (i32, i32) {
    %c0_i32 = arith.constant 0 : i32
    %c0_i32_0 = arith.constant 0 : i32
    %c0_i32_1 = arith.constant 0 : i32
    return %c0_i32, %c0_i32_0 : i32, i32
  }
  func.func @transform_5(%arg0: i32) -> (i32, i32) {
    %c0_i32 = arith.constant 0 : i32
    %c0_i32_0 = arith.constant 0 : i32
    %c0_i32_1 = arith.constant 0 : i32
    return %c0_i32, %c0_i32_0 : i32, i32
  }
  func.func @transform_6(%arg0: i32) -> (i32, i32) {
    %c0_i32 = arith.constant 0 : i32
    %c0_i32_0 = arith.constant 0 : i32
    %c0_i32_1 = arith.constant 0 : i32
    return %c0_i32, %c0_i32_0 : i32, i32
  }
}

</mosaic_0001>

<llo_original>
// kernel: tpu_custom_call.1
$region0: #{tpu_custom_call.1}
  #allocation0 [shape = 'u32[]', space=smem, size = 0x4, offset = 0x4, fixed_abs, tag = 'smem constant byte address 0x4 - core index']
  #allocation1 [shape = 'u32[144,128]{1,0:T(1,128)}', space=vmem, size = 0x12000, scoped, tag = 'internal scratch']
  %s0 = inlined_call_operand.hbm [shape: f32[16,32], index: 0, kind: input, shape index: {}]
  %s1 = inlined_call_operand.vmem [shape: f32[64,64], index: 1, kind: input, shape index: {}]
  %s2 = inlined_call_operand.hbm [shape: f32[8,128], index: 2, kind: input, shape index: {}]
  %s3 = inlined_call_operand.vmem [shape: f32[32,96], index: 3, kind: input, shape index: {}]
  %s4 = inlined_call_operand.hbm [shape: f32[32,64], index: 4, kind: input, shape index: {}]
  %s5 = inlined_call_operand.vmem [shape: f32[64,32], index: 5, kind: input, shape index: {}]
  %s6 = inlined_call_operand.hbm [shape: f32[16,32], index: 6, kind: output, shape index: {}]
  %s7 = sld [smem:[#allocation0]]
  $region46: #{tpu_custom_call.1} parent=0
    _
  %s9 = ssub.s32 1, %s7
  %s10 = scalar_select 0, %s9, %s7
  $region1: #{tpu_custom_call.1} parent=0
    #allocation2 [shape = 'u8[8192]{0}', space=vmem, size = 0x2000, scoped, tag = 'input window, operand 0, single buffered']
    #allocation3 [shape = 's32[1]{0}', space=sflag, size = 0x4, scoped, tag = 'scoped memory for tpu_custom_call.1']
    #allocation4 [shape = 's32[1]{0}', space=sflag, size = 0x4, scoped, tag = 'scoped memory for tpu_custom_call.1']
    #allocation5 [shape = 'u8[4096]{0}', space=vmem, size = 0x1000, scoped, tag = 'input window, operand 2, single buffered']
    #allocation6 [shape = 's32[1]{0}', space=sflag, size = 0x4, scoped, tag = 'scoped memory for tpu_custom_call.1']
    #allocation7 [shape = 'u8[16384]{0}', space=vmem, size = 0x4000, scoped, tag = 'input window, operand 4, single buffered']
    #allocation8 [shape = 'u8[8192]{0}', space=vmem, size = 0x2000, scoped, tag = 'output window, operand 0, single buffered']
    %11 = vsyncpa [#allocation3], 0
    %12 = vsyncpa [#allocation6], 0
    %13 = vsyncpa [#allocation4], 0
    // Predicated region
    $region2: #{tpu_custom_call.1} parent=1 // pred_check
      _
    $region3: #{tpu_custom_call.1} parent=1 // pred_check_branch
      %15 = sbr.rel (0) target = $region5
    $region4: #{tpu_custom_call.1} parent=1 // pred_region
      %s17 = ssub.s32 256, 256
      %18 = vsyncadd [#allocation3], %s17
      %s19 = sshll.u32 [#allocation2], 4
      %s20 = int_to_ptr.vmem [resolvable:$true] %s19
      %25 = dma.hbm_to_vmem [thread:$0]  %s0, 256, %s20, [#allocation3], 128, 128, 8
    $region5: #{tpu_custom_call.1} parent=1 // pred_fallthru
      _
    // Predicated region
    $region6: #{tpu_custom_call.1} parent=1 // pred_check
      _
    $region7: #{tpu_custom_call.1} parent=1 // pred_check_branch
      %27 = sbr.rel (0) target = $region9
    $region8: #{tpu_custom_call.1} parent=1 // pred_region
      _
    $region9: #{tpu_custom_call.1} parent=1 // pred_fallthru
      _
    // Predicated region
    $region10: #{tpu_custom_call.1} parent=1 // pred_check
      _
    $region11: #{tpu_custom_call.1} parent=1 // pred_check_branch
      %29 = sbr.rel (0) target = $region13
    $region12: #{tpu_custom_call.1} parent=1 // pred_region
      %s31 = ssub.s32 128, 128
      %32 = vsyncadd [#allocation6], %s31
      %s34 = sshll.u32 [#allocation5], 4
      %s35 = int_to_ptr.vmem [resolvable:$true] %s34
      %37 = dma.hbm_to_vmem [thread:$0]  %s2, 128, %s35, [#allocation6]
    $region13: #{tpu_custom_call.1} parent=1 // pred_fallthru
      _
    // Predicated region
    $region14: #{tpu_custom_call.1} parent=1 // pred_check
      _
    $region15: #{tpu_custom_call.1} parent=1 // pred_check_branch
      %39 = sbr.rel (0) target = $region17
    $region16: #{tpu_custom_call.1} parent=1 // pred_region
      _
    $region17: #{tpu_custom_call.1} parent=1 // pred_fallthru
      _
    // Predicated region
    $region18: #{tpu_custom_call.1} parent=1 // pred_check
      _
    $region19: #{tpu_custom_call.1} parent=1 // pred_check_branch
      %41 = sbr.rel (0) target = $region21
    $region20: #{tpu_custom_call.1} parent=1 // pred_region
      %s43 = ssub.s32 512, 512
      %44 = vsyncadd [#allocation6], %s43
      %s45 = sshll.u32 [#allocation7], 4
      %s46 = int_to_ptr.vmem [resolvable:$true] %s45
      %51 = dma.hbm_to_vmem [thread:$0]  %s4, 512, %s46, [#allocation6], 128, 128, 8
    $region21: #{tpu_custom_call.1} parent=1 // pred_fallthru
      _
    // Predicated region
    $region22: #{tpu_custom_call.1} parent=1 // pred_check
      _
    $region23: #{tpu_custom_call.1} parent=1 // pred_check_branch
      %53 = sbr.rel (0) target = $region25
    $region24: #{tpu_custom_call.1} parent=1 // pred_region
      _
    $region25: #{tpu_custom_call.1} parent=1 // pred_fallthru
      _
    // Predicated region
    $region26: #{tpu_custom_call.1} parent=1 // pred_check
      _
    $region27: #{tpu_custom_call.1} parent=1 // pred_check_branch
      %55 = sbr.rel (0) target = $region29
    $region28: #{tpu_custom_call.1} parent=1 // pred_region
      %56 = dma.done [#allocation3], 256
    $region29: #{tpu_custom_call.1} parent=1 // pred_fallthru
      _
    // Predicated region
    $region30: #{tpu_custom_call.1} parent=1 // pred_check
      _
    $region31: #{tpu_custom_call.1} parent=1 // pred_check_branch
      %58 = sbr.rel (0) target = $region33
    $region32: #{tpu_custom_call.1} parent=1 // pred_region
      %59 = dma.done [#allocation6], 128
    $region33: #{tpu_custom_call.1} parent=1 // pred_fallthru
      _
    // Predicated region
    $region34: #{tpu_custom_call.1} parent=1 // pred_check
      _
    $region35: #{tpu_custom_call.1} parent=1 // pred_check_branch
      %61 = sbr.rel (0) target = $region37
    $region36: #{tpu_custom_call.1} parent=1 // pred_region
      %62 = dma.done [#allocation6], 512
    $region37: #{tpu_custom_call.1} parent=1 // pred_fallthru
      _
    %v63 = vld [vmem:[#allocation5] sm:$0xff]
    %v64 = vld [vmem:[#allocation2] sm:$0xff]
    %v65 = vld [vmem:[#allocation2 + $0x8] sm:$0xff]
    %vm66 = vcmask 261120
    %v67 = vsel %vm66, %v64, 0.0
    %68 = vadd.xlane.f32.xlu0 %v67
    %v69 = vpop.xlane.xlu0 %68
    %v70 = vsel %vm66, %v65, 0.0
    %71 = vadd.xlane.f32.xlu0 %v70
    %v72 = vpop.xlane.xlu0 %71
    %v73 = vrcp.pop 32.0
    %v74 = vmul.f32 %v69, %v73
    %v75 = vmul.f32 %v72, %v73
    %v76 = vsub.f32 %v64, %v74
    %v77 = vsub.f32 %v65, %v75
    %v78 = vmul.f32 %v76, %v76
    %v79 = vmul.f32 %v77, %v77
    %v80 = vsel %vm66, %v78, 0.0
    %81 = vadd.xlane.f32.xlu0 %v80
    %v82 = vpop.xlane.xlu0 %81
    %v83 = vsel %vm66, %v79, 0.0
    %84 = vadd.xlane.f32.xlu0 %v83
    %v85 = vpop.xlane.xlu0 %84
    %v86 = vmul.f32 %v82, %v73
    %v87 = vmul.f32 %v85, %v73
    %v88 = vadd.f32 %v86, 0.01
    %v89 = vadd.f32 %v87, 0.01
    %v90 = vrsqrt.pop %v88
    %v91 = vrsqrt.pop %v89
    %v92 = vmul.f32 %v76, %v90
    %v93 = vmul.f32 %v77, %v91
    %v94 = vlaneseq
    %v95 = vshrl.u32 %v94, 7
    %v96 = vsub.s32 0, %v95
    %v97 = vrot.slane %v63, %v96
    %v98 = vmul.f32 %v92, %v97
    %v99 = vmul.f32 %v93, %v97
    %v100 = vlaneseq
    %v101 = vshrl.u32 %v100, 7
    %v102 = vsub.s32 1, %v101
    %v103 = vrot.slane %v63, %v102
    %v104 = vadd.f32 %v98, %v103
    %v105 = vadd.f32 %v99, %v103
    %v106 = vld [vmem:[%s3] sm:$0xff]
    %v107 = vld [vmem:[%s3 + $0x8] sm:$0xff]
    %v108 = vld [vmem:[%s3 + $0x10] sm:$0xff]
    %v109 = vld [vmem:[%s3 + $0x18] sm:$0xff]
    %v111 = vsel %vm66, %v104, 0
    %v114 = vsel %vm66, %v105, 0
    %116 = vmatprep.subr.mxu0 0.0
    %117 = vmatpush1.msra.mxu0 %v106
    %118 = vmatprep.subr.mxu0 0.0
    %119 = vmatpush1.msra.mxu0 %v107
    %120 = vmatprep.subr.mxu0 0.0
    %121 = vmatpush1.msra.mxu0 %v108
    %122 = vmatprep.subr.mxu0 0.0
    %123 = vmatpush1.msra.mxu0 %v109
    %124 = vmatprep.subr.mxu0 0.0
    %125 = vmatpush1.msra.mxu0 0.0
    %126 = vmatprep.subr.mxu0 0.0
    %127 = vmatpush1.msra.mxu0 0.0
    %128 = vmatprep.subr.mxu0 0.0
    %129 = vmatpush1.msra.mxu0 0.0
    %130 = vmatprep.subr.mxu0 0.0
    %131 = vmatpush1.msra.mxu0 0.0
    %132 = vmatprep.subr.mxu0 0.0
    %133 = vmatpush1.msra.mxu0 0.0
    %134 = vmatprep.subr.mxu0 0.0
    %135 = vmatpush1.msra.mxu0 0.0
    %136 = vmatprep.subr.mxu0 0.0
    %137 = vmatpush1.msra.mxu0 0.0
    %138 = vmatprep.subr.mxu0 0.0
    %139 = vmatpush1.msra.mxu0 0.0
    %140 = vmatprep.subr.mxu0 0.0
    %141 = vmatpush1.msra.mxu0 0.0
    %142 = vmatprep.subr.mxu0 0.0
    %143 = vmatpush1.msra.mxu0 0.0
    %144 = vmatprep.subr.mxu0 0.0
    %145 = vmatpush1.msra.mxu0 0.0
    %146 = vmatprep.subr.mxu0 0.0
    %147 = vmatpush1.msra.mxu0 0.0
    %148 = vmatprep.subr.mxu0 0.0
    %149 = vmatpush1.msra.mxu0 0.0
    %150 = vmatprep.subr.mxu0 0.0
    %151 = vmatpush1.msra.mxu0 0.0
    %152 = vmatprep.subr.mxu0 0.0
    %153 = vmatpush1.msra.mxu0 0.0
    %154 = vmatprep.subr.mxu0 0.0
    %155 = vmatpush1.msra.mxu0 0.0
    %156 = vmatprep.subr.mxu0 0.0
    %157 = vmatpush1.msra.mxu0 0.0
    %158 = vmatprep.subr.mxu0 0.0
    %159 = vmatpush1.msra.mxu0 0.0
    %160 = vmatprep.subr.mxu0 0.0
    %161 = vmatpush1.msra.mxu0 0.0
    %162 = vmatprep.subr.mxu0 0.0
    %163 = vmatpush1.msra.mxu0 0.0
    %164 = vmatprep.subr.mxu0 0.0
    %165 = vmatpush1.msra.mxu0 0.0
    %166 = vmatprep.subr.mxu0 0.0
    %167 = vmatpush1.msra.mxu0 0.0
    %168 = vmatprep.subr.mxu0 0.0
    %169 = vmatpush1.msra.mxu0 0.0
    %170 = vmatprep.subr.mxu0 0.0
    %171 = vmatpush1.msra.mxu0 0.0
    %172 = vmatprep.subr.mxu0 0.0
    %173 = vmatpush1.msra.mxu0 0.0
    %174 = vmatprep.subr.mxu0 0.0
    %175 = vmatpush1.msra.mxu0 0.0
    %176 = vmatprep.subr.mxu0 0.0
    %177 = vmatpush1.msra.mxu0 0.0
    %178 = vmatprep.subr.mxu0 0.0
    %179 = vmatpush1.msra.mxu0 0.0
    %180 = vmatprep.mubr.f32.mxu0 0.0
    %181 = vmatmul.mubr.f32.gmra.mrb[0].mxu0 %v111
    %v182 = vpop.f32.mrb[0].mxu0
    %v183 = vadd.f32 0.0, %v182
    %v184 = vpop.f32.mrb[0].mxu0
    %185 = vmatprep.mubr.f32.mxu0 0.0
    %186 = vmatmul.mubr.f32.gmra.mrb[0].mxu0 %v114
    %v187 = vpop.f32.mrb[0].mxu0
    %v188 = vadd.f32 0.0, %v187
    %v189 = vpop.f32.mrb[0].mxu0
    %190 = vdwg.mxu0
    %192 = vrot.lane.b32.xlu0 %v183, 104
    %v193 = vpop.permute.xlu0 %192
    %194 = vrot.lane.b32.xlu0 %v183, 80
    %v195 = vpop.permute.xlu0 %194
    %196 = vrot.lane.b32.xlu0 %v183, 56
    %v197 = vpop.permute.xlu0 %196
    %199 = vrot.lane.b32.xlu0 %v188, 104
    %v200 = vpop.permute.xlu0 %199
    %201 = vrot.lane.b32.xlu0 %v188, 80
    %v202 = vpop.permute.xlu0 %201
    %203 = vrot.lane.b32.xlu0 %v188, 56
    %v204 = vpop.permute.xlu0 %203
    %205 = vrot.lane.b32.xlu0 %v183, 112
    %v206 = vpop.permute.xlu0 %205
    %207 = vrot.lane.b32.xlu0 %v193, 112
    %v208 = vpop.permute.xlu0 %207
    %209 = vrot.lane.b32.xlu0 %v195, 112
    %v210 = vpop.permute.xlu0 %209
    %211 = vrot.lane.b32.xlu0 %v197, 112
    %v212 = vpop.permute.xlu0 %211
    %213 = vrot.lane.b32.xlu0 %v188, 112
    %v214 = vpop.permute.xlu0 %213
    %215 = vrot.lane.b32.xlu0 %v200, 112
    %v216 = vpop.permute.xlu0 %215
    %217 = vrot.lane.b32.xlu0 %v202, 112
    %v218 = vpop.permute.xlu0 %217
    %219 = vrot.lane.b32.xlu0 %v204, 112
    %v220 = vpop.permute.xlu0 %219
    %229 = vxpose.xlu0.b32.start [1/16] %v206, 128
    %230 = vxpose.xlu0.b32.cont [2/16] %v208, 128
    %231 = vxpose.xlu0.b32.cont [3/16] %v210, 128
    %232 = vxpose.xlu0.b32.cont [4/16] %v212, 128
    %233 = vxpose.xlu0.b32.cont [5/16] %v214, 128
    %234 = vxpose.xlu0.b32.cont [6/16] %v216, 128
    %235 = vxpose.xlu0.b32.cont [7/16] %v218, 128
    %236 = vxpose.xlu0.b32.cont [8/16] %v220, 128
    %237 = vxpose.xlu0.b32.cont [9/16] 0.0, 128
    %238 = vxpose.xlu0.b32.cont [10/16] 0.0, 128
    %239 = vxpose.xlu0.b32.cont [11/16] 0.0, 128
    %240 = vxpose.xlu0.b32.cont [12/16] 0.0, 128
    %241 = vxpose.xlu0.b32.cont [13/16] 0.0, 128
    %242 = vxpose.xlu0.b32.cont [14/16] 0.0, 128
    %243 = vxpose.xlu0.b32.cont [15/16] 0.0, 128
    %244 = vxpose.xlu0.b32.end [16/16] 0.0, 128
    %v245 = vpop.trf.xlu0
    %v246 = vpop.trf.xlu0
    %v247 = vpop.trf.xlu0
    %v248 = vpop.trf.xlu0
    %v249 = vpop.trf.xlu0
    %v250 = vpop.trf.xlu0
    %v251 = vpop.trf.xlu0
    %v252 = vpop.trf.xlu0
    %v253 = vpop.trf.xlu0
    %v254 = vpop.trf.xlu0
    %v255 = vpop.trf.xlu0
    %v256 = vpop.trf.xlu0
    %v257 = vpop.trf.xlu0
    %v258 = vpop.trf.xlu0
    %v259 = vpop.trf.xlu0
    %v260 = vpop.trf.xlu0
    %v261 = vld [vmem:[%s1] sm:$0xff]
    %v262 = vld [vmem:[%s1 + $0x8] sm:$0xff]
    %v263 = vld [vmem:[%s1 + $0x10] sm:$0xff]
    %v264 = vld [vmem:[%s1 + $0x18] sm:$0xff]
    %v265 = vld [vmem:[%s1 + $0x20] sm:$0xff]
    %v266 = vld [vmem:[%s1 + $0x28] sm:$0xff]
    %v267 = vld [vmem:[%s1 + $0x30] sm:$0xff]
    %v268 = vld [vmem:[%s1 + $0x38] sm:$0xff]
    %269 = vrot.lane.b32.xlu0 %v183, 120
    %v270 = vpop.permute.xlu0 %269
    %271 = vrot.lane.b32.xlu0 %v193, 120
    %v272 = vpop.permute.xlu0 %271
    %273 = vrot.lane.b32.xlu0 %v195, 120
    %v274 = vpop.permute.xlu0 %273
    %275 = vrot.lane.b32.xlu0 %v197, 120
    %v276 = vpop.permute.xlu0 %275
    %277 = vrot.lane.b32.xlu0 %v188, 120
    %v278 = vpop.permute.xlu0 %277
    %279 = vrot.lane.b32.xlu0 %v200, 120
    %v280 = vpop.permute.xlu0 %279
    %281 = vrot.lane.b32.xlu0 %v202, 120
    %v282 = vpop.permute.xlu0 %281
    %283 = vrot.lane.b32.xlu0 %v204, 120
    %v284 = vpop.permute.xlu0 %283
    %vm285 = vcmask 64512
    %v286 = vsel %vm285, %v183, 0
    %v288 = vsel %vm285, %v193, 0
    %v290 = vsel %vm285, %v195, 0
    %v292 = vsel %vm285, %v197, 0
    %v294 = vsel %vm285, %v188, 0
    %v296 = vsel %vm285, %v200, 0
    %v298 = vsel %vm285, %v202, 0
    %v300 = vsel %vm285, %v204, 0
    %v302 = vsel %vm285, %v270, 0
    %v304 = vsel %vm285, %v272, 0
    %v306 = vsel %vm285, %v274, 0
    %v308 = vsel %vm285, %v276, 0
    %v310 = vsel %vm285, %v278, 0
    %v312 = vsel %vm285, %v280, 0
    %v314 = vsel %vm285, %v282, 0
    %v316 = vsel %vm285, %v284, 0
    %318 = vmatprep.subr.mxu0 0.0
    %319 = vmatpush1.xpose.msra.mxu0 %v302
    %320 = vmatprep.subr.mxu0 0.0
    %321 = vmatpush1.xpose.msra.mxu0 %v304
    %322 = vmatprep.subr.mxu0 0.0
    %323 = vmatpush1.xpose.msra.mxu0 %v306
    %324 = vmatprep.subr.mxu0 0.0
    %325 = vmatpush1.xpose.msra.mxu0 %v308
    %326 = vmatprep.subr.mxu0 0.0
    %327 = vmatpush1.xpose.msra.mxu0 %v310
    %328 = vmatprep.subr.mxu0 0.0
    %329 = vmatpush1.xpose.msra.mxu0 %v312
    %330 = vmatprep.subr.mxu0 0.0
    %331 = vmatpush1.xpose.msra.mxu0 %v314
    %332 = vmatprep.subr.mxu0 0.0
    %333 = vmatpush1.xpose.msra.mxu0 %v316
    %334 = vmatprep.subr.mxu0 0.0
    %335 = vmatpush1.xpose.msra.mxu0 0.0
    %336 = vmatprep.subr.mxu0 0.0
    %337 = vmatpush1.xpose.msra.mxu0 0.0
    %338 = vmatprep.subr.mxu0 0.0
    %339 = vmatpush1.xpose.msra.mxu0 0.0
    %340 = vmatprep.subr.mxu0 0.0
    %341 = vmatpush1.xpose.msra.mxu0 0.0
    %342 = vmatprep.subr.mxu0 0.0
    %343 = vmatpush1.xpose.msra.mxu0 0.0
    %344 = vmatprep.subr.mxu0 0.0
    %345 = vmatpush1.xpose.msra.mxu0 0.0
    %346 = vmatprep.subr.mxu0 0.0
    %347 = vmatpush1.xpose.msra.mxu0 0.0
    %348 = vmatprep.subr.mxu0 0.0
    %349 = vmatpush1.xpose.msra.mxu0 0.0
    %350 = vmatprep.subr.mxu0 0.0
    %351 = vmatpush1.xpose.msra.mxu0 0.0
    %352 = vmatprep.subr.mxu0 0.0
    %353 = vmatpush1.xpose.msra.mxu0 0.0
    %354 = vmatprep.subr.mxu0 0.0
    %355 = vmatpush1.xpose.msra.mxu0 0.0
    %356 = vmatprep.subr.mxu0 0.0
    %357 = vmatpush1.xpose.msra.mxu0 0.0
    %358 = vmatprep.subr.mxu0 0.0
    %359 = vmatpush1.xpose.msra.mxu0 0.0
    %360 = vmatprep.subr.mxu0 0.0
    %361 = vmatpush1.xpose.msra.mxu0 0.0
    %362 = vmatprep.subr.mxu0 0.0
    %363 = vmatpush1.xpose.msra.mxu0 0.0
    %364 = vmatprep.subr.mxu0 0.0
    %365 = vmatpush1.xpose.msra.mxu0 0.0
    %366 = vmatprep.subr.mxu0 0.0
    %367 = vmatpush1.xpose.msra.mxu0 0.0
    %368 = vmatprep.subr.mxu0 0.0
    %369 = vmatpush1.xpose.msra.mxu0 0.0
    %370 = vmatprep.subr.mxu0 0.0
    %371 = vmatpush1.xpose.msra.mxu0 0.0
    %372 = vmatprep.subr.mxu0 0.0
    %373 = vmatpush1.xpose.msra.mxu0 0.0
    %374 = vmatprep.subr.mxu0 0.0
    %375 = vmatpush1.xpose.msra.mxu0 0.0
    %376 = vmatprep.subr.mxu0 0.0
    %377 = vmatpush1.xpose.msra.mxu0 0.0
    %378 = vmatprep.subr.mxu0 0.0
    %379 = vmatpush1.xpose.msra.mxu0 0.0
    %380 = vmatprep.subr.mxu0 0.0
    %381 = vmatpush1.xpose.msra.mxu0 0.0
    %382 = vmatprep.mubr.f32.mxu0 0.0
    %383 = vmatmul.mubr.f32.gmra.mrb[0].mxu0 %v286
    %v384 = vpop.f32.mrb[0].mxu0
    %v385 = vadd.f32 %v261, %v384
    %v386 = vpop.f32.mrb[0].mxu0
    %387 = vmatprep.mubr.f32.mxu0 0.0
    %388 = vmatmul.mubr.f32.gmra.mrb[0].mxu0 %v288
    %v389 = vpop.f32.mrb[0].mxu0
    %v390 = vadd.f32 %v262, %v389
    %v391 = vpop.f32.mrb[0].mxu0
    %392 = vmatprep.mubr.f32.mxu0 0.0
    %393 = vmatmul.mubr.f32.gmra.mrb[0].mxu0 %v290
    %v394 = vpop.f32.mrb[0].mxu0
    %v395 = vadd.f32 %v263, %v394
    %v396 = vpop.f32.mrb[0].mxu0
    %397 = vmatprep.mubr.f32.mxu0 0.0
    %398 = vmatmul.mubr.f32.gmra.mrb[0].mxu0 %v292
    %v399 = vpop.f32.mrb[0].mxu0
    %v400 = vadd.f32 %v264, %v399
    %v401 = vpop.f32.mrb[0].mxu0
    %402 = vmatprep.mubr.f32.mxu0 0.0
    %403 = vmatmul.mubr.f32.gmra.mrb[0].mxu0 %v294
    %v404 = vpop.f32.mrb[0].mxu0
    %v405 = vadd.f32 %v265, %v404
    %v406 = vpop.f32.mrb[0].mxu0
    %407 = vmatprep.mubr.f32.mxu0 0.0
    %408 = vmatmul.mubr.f32.gmra.mrb[0].mxu0 %v296
    %v409 = vpop.f32.mrb[0].mxu0
    %v410 = vadd.f32 %v266, %v409
    %v411 = vpop.f32.mrb[0].mxu0
    %412 = vmatprep.mubr.f32.mxu0 0.0
    %413 = vmatmul.mubr.f32.gmra.mrb[0].mxu0 %v298
    %v414 = vpop.f32.mrb[0].mxu0
    %v415 = vadd.f32 %v267, %v414
    %v416 = vpop.f32.mrb[0].mxu0
    %417 = vmatprep.mubr.f32.mxu0 0.0
    %418 = vmatmul.mubr.f32.gmra.mrb[0].mxu0 %v300
    %v419 = vpop.f32.mrb[0].mxu0
    %v420 = vadd.f32 %v268, %v419
    %v421 = vpop.f32.mrb[0].mxu0
    %422 = vdwg.mxu0
    %vm423 = vcmask 523264
    %v424 = vsel %vm423, %v385, -inf
    %425 = vmax.xlane.f32.xlu0 %v424
    %v426 = vpop.xlane.xlu0 %425
    %v427 = vsel %vm423, %v390, -inf
    %428 = vmax.xlane.f32.xlu0 %v427
    %v429 = vpop.xlane.xlu0 %428
    %v430 = vsel %vm423, %v395, -inf
    %431 = vmax.xlane.f32.xlu0 %v430
    %v432 = vpop.xlane.xlu0 %431
    %v433 = vsel %vm423, %v400, -inf
    %434 = vmax.xlane.f32.xlu0 %v433
    %v435 = vpop.xlane.xlu0 %434
    %v436 = vsel %vm423, %v405, -inf
    %437 = vmax.xlane.f32.xlu0 %v436
    %v438 = vpop.xlane.xlu0 %437
    %v439 = vsel %vm423, %v410, -inf
    %440 = vmax.xlane.f32.xlu0 %v439
    %v441 = vpop.xlane.xlu0 %440
    %v442 = vsel %vm423, %v415, -inf
    %443 = vmax.xlane.f32.xlu0 %v442
    %v444 = vpop.xlane.xlu0 %443
    %v445 = vsel %vm423, %v420, -inf
    %446 = vmax.xlane.f32.xlu0 %v445
    %v447 = vpop.xlane.xlu0 %446
    %v448 = vsub.f32 %v385, %v426
    %v449 = vsub.f32 %v390, %v429
    %v450 = vsub.f32 %v395, %v432
    %v451 = vsub.f32 %v400, %v435
    %v452 = vsub.f32 %v405, %v438
    %v453 = vsub.f32 %v410, %v441
    %v454 = vsub.f32 %v415, %v444
    %v455 = vsub.f32 %v420, %v447
    %v456 = vmul.f32 %v448, 1.442695
    %v457 = vpow.pop %v456
    %v458 = vmul.f32 %v449, 1.442695
    %v459 = vpow.pop %v458
    %v460 = vmul.f32 %v450, 1.442695
    %v461 = vpow.pop %v460
    %v462 = vmul.f32 %v451, 1.442695
    %v463 = vpow.pop %v462
    %v464 = vmul.f32 %v452, 1.442695
    %v465 = vpow.pop %v464
    %v466 = vmul.f32 %v453, 1.442695
    %v467 = vpow.pop %v466
    %v468 = vmul.f32 %v454, 1.442695
    %v469 = vpow.pop %v468
    %v470 = vmul.f32 %v455, 1.442695
    %v471 = vpow.pop %v470
    %v472 = vsel %vm423, %v457, 0.0
    %473 = vadd.xlane.f32.xlu0 %v472
    %v474 = vpop.xlane.xlu0 %473
    %v475 = vsel %vm423, %v459, 0.0
    %476 = vadd.xlane.f32.xlu0 %v475
    %v477 = vpop.xlane.xlu0 %476
    %v478 = vsel %vm423, %v461, 0.0
    %479 = vadd.xlane.f32.xlu0 %v478
    %v480 = vpop.xlane.xlu0 %479
    %v481 = vsel %vm423, %v463, 0.0
    %482 = vadd.xlane.f32.xlu0 %v481
    %v483 = vpop.xlane.xlu0 %482
    %v484 = vsel %vm423, %v465, 0.0
    %485 = vadd.xlane.f32.xlu0 %v484
    %v486 = vpop.xlane.xlu0 %485
    %v487 = vsel %vm423, %v467, 0.0
    %488 = vadd.xlane.f32.xlu0 %v487
    %v489 = vpop.xlane.xlu0 %488
    %v490 = vsel %vm423, %v469, 0.0
    %491 = vadd.xlane.f32.xlu0 %v490
    %v492 = vpop.xlane.xlu0 %491
    %v493 = vsel %vm423, %v471, 0.0
    %494 = vadd.xlane.f32.xlu0 %v493
    %v495 = vpop.xlane.xlu0 %494
    %v496 = vrcp.pop %v474
    %v497 = vrcp.pop %v477
    %v498 = vrcp.pop %v480
    %v499 = vrcp.pop %v483
    %v500 = vrcp.pop %v486
    %v501 = vrcp.pop %v489
    %v502 = vrcp.pop %v492
    %v503 = vrcp.pop %v495
    %v504 = vmul.f32 %v474, %v496
    %v505 = vmul.f32 %v477, %v497
    %v506 = vmul.f32 %v480, %v498
    %v507 = vmul.f32 %v483, %v499
    %v508 = vmul.f32 %v486, %v500
    %v509 = vmul.f32 %v489, %v501
    %v510 = vmul.f32 %v492, %v502
    %v511 = vmul.f32 %v495, %v503
    %v512 = vsub.f32 2.0, %v504
    %v513 = vsub.f32 2.0, %v505
    %v514 = vsub.f32 2.0, %v506
    %v515 = vsub.f32 2.0, %v507
    %v516 = vsub.f32 2.0, %v508
    %v517 = vsub.f32 2.0, %v509
    %v518 = vsub.f32 2.0, %v510
    %v519 = vsub.f32 2.0, %v511
    %v520 = vmul.f32 %v496, %v512
    %v521 = vmul.f32 %v497, %v513
    %v522 = vmul.f32 %v498, %v514
    %v523 = vmul.f32 %v499, %v515
    %v524 = vmul.f32 %v500, %v516
    %v525 = vmul.f32 %v501, %v517
    %v526 = vmul.f32 %v502, %v518
    %v527 = vmul.f32 %v503, %v519
    %v528 = vmul.f32 %v457, %v520
    %v529 = vmul.f32 %v459, %v521
    %v530 = vmul.f32 %v461, %v522
    %v531 = vmul.f32 %v463, %v523
    %v532 = vmul.f32 %v465, %v524
    %v533 = vmul.f32 %v467, %v525
    %v534 = vmul.f32 %v469, %v526
    %v535 = vmul.f32 %v471, %v527
    %v537 = vsel %vm423, %v245, 0
    %v540 = vsel %vm423, %v528, 0
    %v543 = vsel %vm423, %v529, 0
    %v546 = vsel %vm423, %v530, 0
    %v549 = vsel %vm423, %v531, 0
    %v552 = vsel %vm423, %v532, 0
    %v555 = vsel %vm423, %v533, 0
    %v558 = vsel %vm423, %v534, 0
    %v561 = vsel %vm423, %v535, 0
    %563 = vmatprep.subr.mxu0 0.0
    %564 = vmatpush1.xpose.msra.mxu0 %v540
    %565 = vmatprep.subr.mxu0 0.0
    %566 = vmatpush1.xpose.msra.mxu0 %v543
    %567 = vmatprep.subr.mxu0 0.0
    %568 = vmatpush1.xpose.msra.mxu0 %v546
    %569 = vmatprep.subr.mxu0 0.0
    %570 = vmatpush1.xpose.msra.mxu0 %v549
    %571 = vmatprep.subr.mxu0 0.0
    %572 = vmatpush1.xpose.msra.mxu0 %v552
    %573 = vmatprep.subr.mxu0 0.0
    %574 = vmatpush1.xpose.msra.mxu0 %v555
    %575 = vmatprep.subr.mxu0 0.0
    %576 = vmatpush1.xpose.msra.mxu0 %v558
    %577 = vmatprep.subr.mxu0 0.0
    %578 = vmatpush1.xpose.msra.mxu0 %v561
    %579 = vmatprep.subr.mxu0 0.0
    %580 = vmatpush1.xpose.msra.mxu0 0.0
    %581 = vmatprep.subr.mxu0 0.0
    %582 = vmatpush1.xpose.msra.mxu0 0.0
    %583 = vmatprep.subr.mxu0 0.0
    %584 = vmatpush1.xpose.msra.mxu0 0.0
    %585 = vmatprep.subr.mxu0 0.0
    %586 = vmatpush1.xpose.msra.mxu0 0.0
    %587 = vmatprep.subr.mxu0 0.0
    %588 = vmatpush1.xpose.msra.mxu0 0.0
    %589 = vmatprep.subr.mxu0 0.0
    %590 = vmatpush1.xpose.msra.mxu0 0.0
    %591 = vmatprep.subr.mxu0 0.0
    %592 = vmatpush1.xpose.msra.mxu0 0.0
    %593 = vmatprep.subr.mxu0 0.0
    %594 = vmatpush1.xpose.msra.mxu0 0.0
    %595 = vmatprep.subr.mxu0 0.0
    %596 = vmatpush1.xpose.msra.mxu0 0.0
    %597 = vmatprep.subr.mxu0 0.0
    %598 = vmatpush1.xpose.msra.mxu0 0.0
    %599 = vmatprep.subr.mxu0 0.0
    %600 = vmatpush1.xpose.msra.mxu0 0.0
    %601 = vmatprep.subr.mxu0 0.0
    %602 = vmatpush1.xpose.msra.mxu0 0.0
    %603 = vmatprep.subr.mxu0 0.0
    %604 = vmatpush1.xpose.msra.mxu0 0.0
    %605 = vmatprep.subr.mxu0 0.0
    %606 = vmatpush1.xpose.msra.mxu0 0.0
    %607 = vmatprep.subr.mxu0 0.0
    %608 = vmatpush1.xpose.msra.mxu0 0.0
    %609 = vmatprep.subr.mxu0 0.0
    %610 = vmatpush1.xpose.msra.mxu0 0.0
    %611 = vmatprep.subr.mxu0 0.0
    %612 = vmatpush1.xpose.msra.mxu0 0.0
    %613 = vmatprep.subr.mxu0 0.0
    %614 = vmatpush1.xpose.msra.mxu0 0.0
    %615 = vmatprep.subr.mxu0 0.0
    %616 = vmatpush1.xpose.msra.mxu0 0.0
    %617 = vmatprep.subr.mxu0 0.0
    %618 = vmatpush1.xpose.msra.mxu0 0.0
    %619 = vmatprep.subr.mxu0 0.0
    %620 = vmatpush1.xpose.msra.mxu0 0.0
    %621 = vmatprep.subr.mxu0 0.0
    %622 = vmatpush1.xpose.msra.mxu0 0.0
    %623 = vmatprep.subr.mxu0 0.0
    %624 = vmatpush1.xpose.msra.mxu0 0.0
    %625 = vmatprep.subr.mxu0 0.0
    %626 = vmatpush1.xpose.msra.mxu0 0.0
    %627 = vmatprep.mubr.f32.mxu0 0.0
    %628 = vmatmul.mubr.f32.gmra.mrb[0].mxu0 %v537
    %v629 = vpop.f32.mrb[0].mxu0
    %v630 = vadd.f32 0.0, %v629
    %v631 = vpop.f32.mrb[0].mxu0
    %632 = vdwg.mxu0
    %634 = vrot.lane.b32.xlu0 %v630, 96
    %v635 = vpop.permute.xlu0 %634
    %v637 = vlaneseq
    %v638 = vshrl.u32 %v637, 7
    %v639 = vsub.s32 4, %v638
    %v640 = vrot.slane %v63, %v639
    %v641 = vmul.f32 %v630, %v640
    %v642 = vmul.f32 %v635, %v640
    %v643 = vadd.f32 %v104, %v641
    %v644 = vadd.f32 %v105, %v642
    %v645 = vsel %vm66, %v643, 0.0
    %646 = vadd.xlane.f32.xlu0 %v645
    %v647 = vpop.xlane.xlu0 %646
    %v648 = vsel %vm66, %v644, 0.0
    %649 = vadd.xlane.f32.xlu0 %v648
    %v650 = vpop.xlane.xlu0 %649
    %v651 = vmul.f32 %v647, %v73
    %v652 = vmul.f32 %v650, %v73
    %v653 = vsub.f32 %v643, %v651
    %v654 = vsub.f32 %v644, %v652
    %v655 = vmul.f32 %v653, %v653
    %v656 = vmul.f32 %v654, %v654
    %v657 = vsel %vm66, %v655, 0.0
    %658 = vadd.xlane.f32.xlu0 %v657
    %v659 = vpop.xlane.xlu0 %658
    %v660 = vsel %vm66, %v656, 0.0
    %661 = vadd.xlane.f32.xlu0 %v660
    %v662 = vpop.xlane.xlu0 %661
    %v663 = vmul.f32 %v659, %v73
    %v664 = vmul.f32 %v662, %v73
    %v665 = vadd.f32 %v663, 0.01
    %v666 = vadd.f32 %v664, 0.01
    %v667 = vrsqrt.pop %v665
    %v668 = vrsqrt.pop %v666
    %v669 = vmul.f32 %v653, %v667
    %v670 = vmul.f32 %v654, %v668
    %v671 = vlaneseq
    %v672 = vshrl.u32 %v671, 7
    %v673 = vsub.s32 2, %v672
    %v674 = vrot.slane %v63, %v673
    %v675 = vmul.f32 %v669, %v674
    %v676 = vmul.f32 %v670, %v674
    %v677 = vlaneseq
    %v678 = vshrl.u32 %v677, 7
    %v679 = vsub.s32 3, %v678
    %v680 = vrot.slane %v63, %v679
    %v681 = vadd.f32 %v675, %v680
    %v682 = vadd.f32 %v676, %v680
    %v683 = vld [vmem:[#allocation7] sm:$0xff]
    %v684 = vld [vmem:[#allocation7 + $0x8] sm:$0xff]
    %v685 = vld [vmem:[#allocation7 + $0x10] sm:$0xff]
    %v686 = vld [vmem:[#allocation7 + $0x18] sm:$0xff]
    %v687 = vlaneseq
    %v688 = vshrl.u32 %v687, 7
    %v689 = vsub.s32 6, %v688
    %v690 = vrot.slane %v63, %v689
    %v692 = vsel %vm66, %v681, 0
    %v695 = vsel %vm66, %v682, 0
    %697 = vmatprep.subr.mxu0 0.0
    %698 = vmatpush1.msra.mxu0 %v683
    %699 = vmatprep.subr.mxu0 0.0
    %700 = vmatpush1.msra.mxu0 %v684
    %701 = vmatprep.subr.mxu0 0.0
    %702 = vmatpush1.msra.mxu0 %v685
    %703 = vmatprep.subr.mxu0 0.0
    %704 = vmatpush1.msra.mxu0 %v686
    %705 = vmatprep.subr.mxu0 0.0
    %706 = vmatpush1.msra.mxu0 0.0
    %707 = vmatprep.subr.mxu0 0.0
    %708 = vmatpush1.msra.mxu0 0.0
    %709 = vmatprep.subr.mxu0 0.0
    %710 = vmatpush1.msra.mxu0 0.0
    %711 = vmatprep.subr.mxu0 0.0
    %712 = vmatpush1.msra.mxu0 0.0
    %713 = vmatprep.subr.mxu0 0.0
    %714 = vmatpush1.msra.mxu0 0.0
    %715 = vmatprep.subr.mxu0 0.0
    %716 = vmatpush1.msra.mxu0 0.0
    %717 = vmatprep.subr.mxu0 0.0
    %718 = vmatpush1.msra.mxu0 0.0
    %719 = vmatprep.subr.mxu0 0.0
    %720 = vmatpush1.msra.mxu0 0.0
    %721 = vmatprep.subr.mxu0 0.0
    %722 = vmatpush1.msra.mxu0 0.0
    %723 = vmatprep.subr.mxu0 0.0
    %724 = vmatpush1.msra.mxu0 0.0
    %725 = vmatprep.subr.mxu0 0.0
    %726 = vmatpush1.msra.mxu0 0.0
    %727 = vmatprep.subr.mxu0 0.0
    %728 = vmatpush1.msra.mxu0 0.0
    %729 = vmatprep.subr.mxu0 0.0
    %730 = vmatpush1.msra.mxu0 0.0
    %731 = vmatprep.subr.mxu0 0.0
    %732 = vmatpush1.msra.mxu0 0.0
    %733 = vmatprep.subr.mxu0 0.0
    %734 = vmatpush1.msra.mxu0 0.0
    %735 = vmatprep.subr.mxu0 0.0
    %736 = vmatpush1.msra.mxu0 0.0
    %737 = vmatprep.subr.mxu0 0.0
    %738 = vmatpush1.msra.mxu0 0.0
    %739 = vmatprep.subr.mxu0 0.0
    %740 = vmatpush1.msra.mxu0 0.0
    %741 = vmatprep.subr.mxu0 0.0
    %742 = vmatpush1.msra.mxu0 0.0
    %743 = vmatprep.subr.mxu0 0.0
    %744 = vmatpush1.msra.mxu0 0.0
    %745 = vmatprep.subr.mxu0 0.0
    %746 = vmatpush1.msra.mxu0 0.0
    %747 = vmatprep.subr.mxu0 0.0
    %748 = vmatpush1.msra.mxu0 0.0
    %749 = vmatprep.subr.mxu0 0.0
    %750 = vmatpush1.msra.mxu0 0.0
    %751 = vmatprep.subr.mxu0 0.0
    %752 = vmatpush1.msra.mxu0 0.0
    %753 = vmatprep.subr.mxu0 0.0
    %754 = vmatpush1.msra.mxu0 0.0
    %755 = vmatprep.subr.mxu0 0.0
    %756 = vmatpush1.msra.mxu0 0.0
    %757 = vmatprep.subr.mxu0 0.0
    %758 = vmatpush1.msra.mxu0 0.0
    %759 = vmatprep.subr.mxu0 0.0
    %760 = vmatpush1.msra.mxu0 0.0
    %761 = vmatprep.mubr.f32.mxu0 0.0
    %762 = vmatmul.mubr.f32.gmra.mrb[0].mxu0 %v692
    %v763 = vpop.f32.mrb[0].mxu0
    %v764 = vadd.f32 %v690, %v763
    %v765 = vpop.f32.mrb[0].mxu0
    %766 = vmatprep.mubr.f32.mxu0 0.0
    %767 = vmatmul.mubr.f32.gmra.mrb[0].mxu0 %v695
    %v768 = vpop.f32.mrb[0].mxu0
    %v769 = vadd.f32 %v690, %v768
    %v770 = vpop.f32.mrb[0].mxu0
    %771 = vdwg.mxu0
    %v772 = vmax.f32 %v764, 0.0
    %v773 = vmax.f32 %v769, 0.0
    %v774 = vld [vmem:[%s5] sm:$0xff]
    %v775 = vld [vmem:[%s5 + $0x8] sm:$0xff]
    %v776 = vld [vmem:[%s5 + $0x10] sm:$0xff]
    %v777 = vld [vmem:[%s5 + $0x18] sm:$0xff]
    %v778 = vld [vmem:[%s5 + $0x20] sm:$0xff]
    %v779 = vld [vmem:[%s5 + $0x28] sm:$0xff]
    %v780 = vld [vmem:[%s5 + $0x30] sm:$0xff]
    %v781 = vld [vmem:[%s5 + $0x38] sm:$0xff]
    %v782 = vlaneseq
    %v783 = vshrl.u32 %v782, 7
    %v784 = vsub.s32 5, %v783
    %v785 = vrot.slane %v63, %v784
    %v787 = vsel %vm423, %v772, 0
    %v790 = vsel %vm423, %v773, 0
    %792 = vmatprep.subr.mxu0 0.0
    %793 = vmatpush1.msra.mxu0 %v774
    %794 = vmatprep.subr.mxu0 0.0
    %795 = vmatpush1.msra.mxu0 %v775
    %796 = vmatprep.subr.mxu0 0.0
    %797 = vmatpush1.msra.mxu0 %v776
    %798 = vmatprep.subr.mxu0 0.0
    %799 = vmatpush1.msra.mxu0 %v777
    %800 = vmatprep.subr.mxu0 0.0
    %801 = vmatpush1.msra.mxu0 %v778
    %802 = vmatprep.subr.mxu0 0.0
    %803 = vmatpush1.msra.mxu0 %v779
    %804 = vmatprep.subr.mxu0 0.0
    %805 = vmatpush1.msra.mxu0 %v780
    %806 = vmatprep.subr.mxu0 0.0
    %807 = vmatpush1.msra.mxu0 %v781
    %808 = vmatprep.subr.mxu0 0.0
    %809 = vmatpush1.msra.mxu0 0.0
    %810 = vmatprep.subr.mxu0 0.0
    %811 = vmatpush1.msra.mxu0 0.0
    %812 = vmatprep.subr.mxu0 0.0
    %813 = vmatpush1.msra.mxu0 0.0
    %814 = vmatprep.subr.mxu0 0.0
    %815 = vmatpush1.msra.mxu0 0.0
    %816 = vmatprep.subr.mxu0 0.0
    %817 = vmatpush1.msra.mxu0 0.0
    %818 = vmatprep.subr.mxu0 0.0
    %819 = vmatpush1.msra.mxu0 0.0
    %820 = vmatprep.subr.mxu0 0.0
    %821 = vmatpush1.msra.mxu0 0.0
    %822 = vmatprep.subr.mxu0 0.0
    %823 = vmatpush1.msra.mxu0 0.0
    %824 = vmatprep.subr.mxu0 0.0
    %825 = vmatpush1.msra.mxu0 0.0
    %826 = vmatprep.subr.mxu0 0.0
    %827 = vmatpush1.msra.mxu0 0.0
    %828 = vmatprep.subr.mxu0 0.0
    %829 = vmatpush1.msra.mxu0 0.0
    %830 = vmatprep.subr.mxu0 0.0
    %831 = vmatpush1.msra.mxu0 0.0
    %832 = vmatprep.subr.mxu0 0.0
    %833 = vmatpush1.msra.mxu0 0.0
    %834 = vmatprep.subr.mxu0 0.0
    %835 = vmatpush1.msra.mxu0 0.0
    %836 = vmatprep.subr.mxu0 0.0
    %837 = vmatpush1.msra.mxu0 0.0
    %838 = vmatprep.subr.mxu0 0.0
    %839 = vmatpush1.msra.mxu0 0.0
    %840 = vmatprep.subr.mxu0 0.0
    %841 = vmatpush1.msra.mxu0 0.0
    %842 = vmatprep.subr.mxu0 0.0
    %843 = vmatpush1.msra.mxu0 0.0
    %844 = vmatprep.subr.mxu0 0.0
    %845 = vmatpush1.msra.mxu0 0.0
    %846 = vmatprep.subr.mxu0 0.0
    %847 = vmatpush1.msra.mxu0 0.0
    %848 = vmatprep.subr.mxu0 0.0
    %849 = vmatpush1.msra.mxu0 0.0
    %850 = vmatprep.subr.mxu0 0.0
    %851 = vmatpush1.msra.mxu0 0.0
    %852 = vmatprep.subr.mxu0 0.0
    %853 = vmatpush1.msra.mxu0 0.0
    %854 = vmatprep.subr.mxu0 0.0
    %855 = vmatpush1.msra.mxu0 0.0
    %856 = vmatprep.mubr.f32.mxu0 0.0
    %857 = vmatmul.mubr.f32.gmra.mrb[0].mxu0 %v787
    %v858 = vpop.f32.mrb[0].mxu0
    %v859 = vadd.f32 %v785, %v858
    %v860 = vpop.f32.mrb[0].mxu0
    %861 = vmatprep.mubr.f32.mxu0 0.0
    %862 = vmatmul.mubr.f32.gmra.mrb[0].mxu0 %v790
    %v863 = vpop.f32.mrb[0].mxu0
    %v864 = vadd.f32 %v785, %v863
    %v865 = vpop.f32.mrb[0].mxu0
    %866 = vdwg.mxu0
    %v867 = vadd.f32 %v681, %v859
    %v868 = vadd.f32 %v682, %v864
    %869 = vst.msk [vmem:[#allocation8] sm:$0xff] %vm66, %v867
    %870 = vst.msk [vmem:[#allocation8 + $0x8] sm:$0xff] %vm66, %v868
    // Predicated region
    $region38: #{tpu_custom_call.1} parent=1 // pred_check
      _
    $region39: #{tpu_custom_call.1} parent=1 // pred_check_branch
      %872 = sbr.rel (0) target = $region41
    $region40: #{tpu_custom_call.1} parent=1 // pred_region
      %s874 = ssub.s32 256, 256
      %875 = vsyncadd [#allocation4], %s874
      %s876 = sshll.u32 [#allocation8], 4
      %s877 = int_to_ptr.vmem [resolvable:$true] %s876
      %882 = dma.vmem_to_hbm [thread:$0]  %s877, 256, %s6, [#allocation4], 128, 128, 8
    $region41: #{tpu_custom_call.1} parent=1 // pred_fallthru
      _
    // Predicated region
    $region42: #{tpu_custom_call.1} parent=1 // pred_check
      _
    $region43: #{tpu_custom_call.1} parent=1 // pred_check_branch
      %884 = sbr.rel (0) target = $region45
    $region44: #{tpu_custom_call.1} parent=1 // pred_region
      %885 = dma.done [#allocation4], 256
    $region45: #{tpu_custom_call.1} parent=1 // pred_fallthru
      _
    %886 = vsyncpa [#allocation3], 1
    %887 = vsyncpa [#allocation6], 1
    %888 = vsyncpa [#allocation4], 1

</llo_original>
